<compile_context>
chip_gen: v7x
topology: tpu7x:2x2x1
jax: 0.10.0
libtpu: 0.0.40
codegen_flags: <defaults>
</compile_context>

<pallas_src>
import functools

import jax
import jax.numpy as jnp
import numpy as np
from jax.experimental import pallas as pl
from jax.experimental.pallas import tpu as pltpu

LANE = 128


def _gated_block_kernel(x_ref, xh_ref, w1_ref, b1_ref, w2_ref, b2_ref,
                        wd_ref, bd_ref, o_ref, *scratch,
                        K, dil, P, Cin, Cout, TT,
                        use_stack1, use_stack2, split_store):
    """One (batch, time-tile) grid step.  Both grid axes are independent.

    x_ref  : (Cin, TT)                 bf16 input tile (time on lanes)
    xh_ref : (Cin, 2P)                 bf16 causal halo x[:, t0-2P : t0] (zeros for t==0)
    w1_ref : (2Cout, K*Cin) or (K, 2Cout, Cin)    bf16 conv1 weight (folded / per-tap)
    b1_ref : (2Cout, 1)                f32
    w2_ref : (2Cout, K*2Cout) or (K, 2Cout, 2Cout) bf16 conv2 weight
    b2_ref : (2Cout, 1)                f32
    wd_ref : (Cout, Cin)               bf16 1x1 downsample weight
    bd_ref : (Cout, 1)                 f32
    o_ref  : (2Cout, TT)               output tile

    scratch (VMEM):
      xs_ref  : (Cin, TT + 2P)   contiguous [halo | tile] input window
      h1s_ref : (2Cout, TT + P)  gated conv1 output (P extra left cols = conv2 halo)
      st1_ref : (K*Cin, TT + P)  conv1 im2col stack      (only if use_stack1)
      st2_ref : (K*2Cout, TT)    conv2 im2col stack      (only if use_stack2)
    """
    it = iter(scratch)
    xs_ref = next(it)
    h1s_ref = next(it)
    st1_ref = next(it) if use_stack1 else None
    st2_ref = next(it) if use_stack2 else None

    t = pl.program_id(1)
    C2 = 2 * Cout
    L1 = TT + P                                   # conv1 output cols per tile

    xblk = x_ref[...]                             # (Cin, TT) bf16

    # ---- contiguous [halo | tile] window: the per-tap views below straddle
    #      the halo/tile boundary, so they need one contiguous VMEM buffer. --
    xs_ref[:, :2 * P] = xh_ref[...]
    xs_ref[:, 2 * P:] = xblk

    # ---- conv1 (causal dilated conv folded into MXU contractions) ----------
    if use_stack1:
        # small-channel regime: one matmul with the K taps folded into the
        # contraction dim (K*Cin still < one MXU granule).
        for k in range(K):                        # tiny static unroll
            st1_ref[k * Cin:(k + 1) * Cin, :] = xs_ref[:, k * dil:k * dil + L1]
        acc1 = jnp.dot(w1_ref[...], st1_ref[...],
                       preferred_element_type=jnp.float32)        # (C2, L1) f32
    else:
        # large-channel regime: K accumulating dots on shifted views — no
        # im2col store/reload traffic, no st1 scratch.
        acc1 = jnp.dot(w1_ref[0], xs_ref[:, 0:L1],
                       preferred_element_type=jnp.float32)
        for k in range(1, K):
            acc1 = acc1 + jnp.dot(w1_ref[k], xs_ref[:, k * dil:k * dil + L1],
                                  preferred_element_type=jnp.float32)
    acc1 = acc1 + b1_ref[...]                                     # bias once
    gate1 = acc1[Cout:, :]
    h1s_ref[:Cout, :] = (acc1[:Cout, :] * jax.nn.sigmoid(gate1)
                         ).astype(h1s_ref.dtype)                  # direct stores,
    h1s_ref[Cout:, :] = gate1.astype(h1s_ref.dtype)               # no concatenate
    # dropout1 -> identity (inference)
    # TODO(synk): training-mode dropout would need pltpu.prng_* masking here.

    # conv2's left zero-padding at the sequence start: the reference feeds
    # conv2 with ZEROS at negative times, not gated(conv1(0) + b1).
    @pl.when(t == 0)
    def _():
        h1s_ref[:, :P] = jnp.zeros((C2, P), h1s_ref.dtype)

    # ---- conv2: same two strategies on the gated hidden --------------------
    if use_stack2:
        for k in range(K):
            st2_ref[k * C2:(k + 1) * C2, :] = h1s_ref[:, k * dil:k * dil + TT]
        acc2 = jnp.dot(w2_ref[...], st2_ref[...],
                       preferred_element_type=jnp.float32)        # (C2, TT) f32
    else:
        acc2 = jnp.dot(w2_ref[0], h1s_ref[:, 0:TT],
                       preferred_element_type=jnp.float32)
        for k in range(1, K):
            acc2 = acc2 + jnp.dot(w2_ref[k], h1s_ref[:, k * dil:k * dil + TT],
                                  preferred_element_type=jnp.float32)
    acc2 = acc2 + b2_ref[...]
    gate2 = acc2[Cout:, :]
    hid2 = acc2[:Cout, :] * jax.nn.sigmoid(gate2)
    # dropout2 -> identity (inference)

    # ---- 1x1 downsample residual, duplicated on channels -------------------
    res = jnp.dot(wd_ref[...], xblk,
                  preferred_element_type=jnp.float32) + bd_ref[...]   # (Cout, TT)
    top = (hid2 + res).astype(o_ref.dtype)
    bot = (gate2 + res).astype(o_ref.dtype)
    if split_store:                         # Cout sublane-aligned: two unmasked stores
        o_ref[:Cout, :] = top
        o_ref[Cout:, :] = bot
    else:                                   # avoid sublane-masked half stores
        o_ref[...] = jnp.concatenate([top, bot], axis=0)


def gated_temporal_block_first(x, w1, b1, w2, b2, wd, bd, *,
                               kernel_size, dilation, padding,
                               time_tile=1024, out_dtype=None,
                               stack_channel_threshold=128):
    """x: (B, Cin, T); w1: (2Cout, Cin, K); w2: (2Cout, 2Cout, K); wd: (Cout, Cin).
    Returns (B, 2Cout, T) in out_dtype (default x.dtype); bf16 MXU compute,
    f32 accumulation, f32 biases.

    Per-generation tuning: time_tile 1024 is safe everywhere; on v5e/v6e
    (128 MiB VMEM) time_tile=2048 is worth trying, on v7x stay <=1024 unless
    the channel counts are past stack_channel_threshold (no st1/st2 scratch).

    # TODO(synk): for trained (non-init) checkpoints apply weight_norm's
    # g * v / ||v|| to w1/w2 before calling (identity at PyTorch init).
    # TODO(synk): downsample=None (Cin == Cout identity residual) and
    # kernel_size==1 (padding==0) variants are not wired up.
    """
    B, Cin, T = x.shape
    C2 = w1.shape[0]
    Cout = C2 // 2
    K, dil, P = kernel_size, dilation, padding
    assert P == dil * (K - 1), "chomp only cancels causal padding"
    assert P > 0, "kernel_size == 1 (padding == 0) path not implemented"
    out_dtype = x.dtype if out_dtype is None else out_dtype
    out_itemsize = int(jnp.dtype(out_dtype).itemsize)

    # ---- lane-aligned time tile; the 2P halo must fit within one tile ------
    tt = max(LANE, (int(time_tile) // LANE) * LANE)
    TT = min(tt, pl.cdiv(T, LANE) * LANE)
    TT = max(TT, pl.cdiv(2 * P, LANE) * LANE)
    nT = pl.cdiv(T, TT)
    T_pad = nT * TT

    # ---- bf16 activations/weights (HBM + MXU), f32 biases ------------------
    xb = x.astype(jnp.bfloat16)
    if T_pad != T:
        xb = jnp.pad(xb, ((0, 0), (0, 0), (0, T_pad - T)))       # right pad only

    # Per-tile causal halo: tile t needs x[:, t*TT - 2P : t*TT] (zeros before
    # the sequence start).  Tiny (B * nT * Cin * 2P) gather built once in the
    # wrapper; makes the time grid axis order-independent (megacore-parallel).
    xpad = jnp.pad(xb, ((0, 0), (0, 0), (2 * P, 0)))
    xh = xpad[:, :, :T_pad].reshape(B, Cin, nT, TT)[:, :, :, :2 * P]
    xh = jnp.transpose(xh, (0, 2, 1, 3))                         # (B, nT, Cin, 2P)

    # ---- per-conv MXU strategy (review item #1) -----------------------------
    use_stack1 = Cin < stack_channel_threshold
    use_stack2 = C2 < stack_channel_threshold
    if use_stack1:   # folded: (O, I, K) -> (O, K*I)
        w1p = jnp.transpose(w1, (0, 2, 1)).reshape(C2, K * Cin).astype(jnp.bfloat16)
        w1_spec = pl.BlockSpec((C2, K * Cin), lambda b, t: (0, 0))
    else:            # per-tap: (O, I, K) -> (K, O, I)
        w1p = jnp.transpose(w1, (2, 0, 1)).astype(jnp.bfloat16)
        w1_spec = pl.BlockSpec((K, C2, Cin), lambda b, t: (0, 0, 0))
    if use_stack2:
        w2p = jnp.transpose(w2, (0, 2, 1)).reshape(C2, K * C2).astype(jnp.bfloat16)
        w2_spec = pl.BlockSpec((C2, K * C2), lambda b, t: (0, 0))
    else:
        w2p = jnp.transpose(w2, (2, 0, 1)).astype(jnp.bfloat16)
        w2_spec = pl.BlockSpec((K, C2, C2), lambda b, t: (0, 0, 0))

    wdb = wd.astype(jnp.bfloat16)
    b1c = b1.reshape(C2, 1).astype(jnp.float32)
    b2c = b2.reshape(C2, 1).astype(jnp.float32)
    bdc = bd.reshape(Cout, 1).astype(jnp.float32)

    # single full-block store when half-stores would be sublane-masked
    sub_pack = 8 * max(1, 4 // out_itemsize)
    split_store = (Cout % sub_pack) == 0

    scratch = [pltpu.VMEM((Cin, TT + 2 * P), jnp.bfloat16),
               pltpu.VMEM((C2, TT + P), jnp.bfloat16)]
    if use_stack1:
        scratch.append(pltpu.VMEM((K * Cin, TT + P), jnp.bfloat16))
    if use_stack2:
        scratch.append(pltpu.VMEM((K * C2, TT), jnp.bfloat16))

    # ---- VMEM budget: scratch + double-buffered blocks + weights, clamped
    #      to 64 MiB so the same request is valid on v7x (64 MiB/TC) and
    #      v5e/v6e (128 MiB). ------------------------------------------------
    scratch_bytes = (Cin * (TT + 2 * P) + C2 * (TT + P)) * 2
    if use_stack1:
        scratch_bytes += K * Cin * (TT + P) * 2
    if use_stack2:
        scratch_bytes += K * C2 * TT * 2
    block_bytes = 2 * (Cin * TT * 2 + Cin * 2 * P * 2 + C2 * TT * out_itemsize)
    weight_bytes = 2 * ((w1p.size + w2p.size + wdb.size) * 2
                        + (b1c.size + b2c.size + bdc.size) * 4)
    vmem_need = scratch_bytes + block_bytes + weight_bytes + (4 << 20)
    vmem_limit = int(min(64 << 20, max(16 << 20, vmem_need)))

    kern = functools.partial(_gated_block_kernel, K=K, dil=dil, P=P,
                             Cin=Cin, Cout=Cout, TT=TT,
                             use_stack1=use_stack1, use_stack2=use_stack2,
                             split_store=split_store)

    flops = 2 * B * T_pad * (C2 * K * Cin + C2 * K * C2 + Cout * Cin)
    bytes_accessed = (xb.size * 2 + xh.size * 2
                      + (w1p.size + w2p.size + wdb.size) * 2
                      + (b1c.size + b2c.size + bdc.size) * 4
                      + B * C2 * T_pad * out_itemsize)

    out = pl.pallas_call(
        kern,
        out_shape=jax.ShapeDtypeStruct((B, C2, T_pad), out_dtype),
        grid_spec=pltpu.PrefetchScalarGridSpec(
            num_scalar_prefetch=0,
            grid=(B, nT),
            in_specs=[
                pl.BlockSpec((None, Cin, TT), lambda b, t: (b, 0, t)),
                pl.BlockSpec((None, None, Cin, 2 * P), lambda b, t: (b, t, 0, 0)),
                w1_spec,
                pl.BlockSpec((C2, 1), lambda b, t: (0, 0)),
                w2_spec,
                pl.BlockSpec((C2, 1), lambda b, t: (0, 0)),
                pl.BlockSpec((Cout, Cin), lambda b, t: (0, 0)),
                pl.BlockSpec((Cout, 1), lambda b, t: (0, 0)),
            ],
            out_specs=pl.BlockSpec((None, C2, TT), lambda b, t: (b, 0, t)),
            scratch_shapes=scratch,
        ),
        compiler_params=pltpu.CompilerParams(
            # Each tile carries its own causal halo as an input, so both grid
            # axes are independent (any order, any core split is correct).
            dimension_semantics=("parallel", "parallel"),
            vmem_limit_bytes=vmem_limit,
        ),
        cost_estimate=pl.CostEstimate(
            flops=flops,
            transcendentals=2 * B * Cout * T_pad,
            bytes_accessed=bytes_accessed,
        ),
    )(xb, xh, w1p, b1c, w2p, b2c, wdb, bdc)

    return out[:, :, :T] if T_pad != T else out


# ----------------------------- pure-JAX reference -----------------------------
def _reference(x, w1, b1, w2, b2, wd, bd, *, kernel_size, dilation, padding):
    def conv1d(h, w, b, pad, dil):
        y = jax.lax.conv_general_dilated(
            h, w, window_strides=(1,), padding=[(pad, pad)],
            rhs_dilation=(dil,), dimension_numbers=("NCH", "OIH", "NCH"))
        return y + b[None, :, None]

    Cout = w1.shape[0] // 2
    P = padding

    y1 = conv1d(x, w1, b1, P, dilation)
    hid, gate = y1[:, :Cout], y1[:, Cout:]
    h = jnp.concatenate([hid * jax.nn.sigmoid(gate), gate], axis=1)
    h = h[:, :, : h.shape[2] - P]                      # Chomp1d

    y2 = conv1d(h, w2, b2, P, dilation)
    hid, gate = y2[:, :Cout], y2[:, Cout:]
    h = jnp.concatenate([hid * jax.nn.sigmoid(gate), gate], axis=1)
    h = h[:, :, : h.shape[2] - P]                      # Chomp1d

    res = jnp.einsum("oi,bit->bot", wd, x) + bd[None, :, None]
    return h + jnp.concatenate([res, res], axis=1)


def _run_case(B, Cin, Cout, T, K, dil, *, time_tile, stack_threshold, seed):
    P = dil * (K - 1)
    key = jax.random.PRNGKey(seed)
    kx, k1, k2, k3, k4, k5, k6 = jax.random.split(key, 7)

    x = jax.random.normal(kx, (B, Cin, T), dtype=jnp.float32)
    # deterministic synthetic params (same shapes / init scales as the module)
    w1 = 0.01 * jax.random.normal(k1, (2 * Cout, Cin, K), dtype=jnp.float32)
    w2 = 0.01 * jax.random.normal(k2, (2 * Cout, 2 * Cout, K), dtype=jnp.float32)
    wd = 0.1 * jax.random.normal(k3, (Cout, Cin), dtype=jnp.float32)
    b1 = 0.01 * jax.random.normal(k4, (2 * Cout,), dtype=jnp.float32)
    b2 = 0.01 * jax.random.normal(k5, (2 * Cout,), dtype=jnp.float32)
    bd = 0.01 * jax.random.normal(k6, (Cout,), dtype=jnp.float32)

    out = gated_temporal_block_first(x, w1, b1, w2, b2, wd, bd,
                                     kernel_size=K, dilation=dil, padding=P,
                                     time_tile=time_tile,
                                     stack_channel_threshold=stack_threshold)
    out = jax.block_until_ready(out)

    # reference on the same bf16-rounded activations/weights (the kernel runs
    # the MXU in bf16 with f32 accumulation); biases stay f32.
    r = lambda a: a.astype(jnp.bfloat16).astype(jnp.float32)
    ref = _reference(r(x), r(w1), b1, r(w2), b2, r(wd), bd,
                     kernel_size=K, dilation=dil, padding=P)
    np.testing.assert_allclose(np.asarray(out), np.asarray(ref),
                               rtol=1e-2, atol=2e-3)
    assert out.shape == (B, 2 * Cout, T)


if __name__ == "__main__":
    # small single-tile case, folded-stack MXU path (tiny channels)
    _run_case(2, 4, 8, 16, 3, 1, time_tile=1024, stack_threshold=128, seed=0)
    # multi-tile case (3 tiles of 128) with dilation=2 and ragged T:
    # exercises the per-tile causal halo input and the tile-0 conv2 zero-halo.
    _run_case(2, 4, 8, 300, 3, 2, time_tile=128, stack_threshold=128, seed=1)
    # force the K-accumulating-dot path (no im2col stack scratch)
    _run_case(1, 4, 8, 300, 3, 1, time_tile=128, stack_threshold=0, seed=2)
    print("KERNEL_OK")
</pallas_src>

<mosaic_0001>
module attributes {stable_mosaic.version = 11 : i64} {
  func.func @_gated_block_kernel(%arg0: i32, %arg1: i32, %arg2: memref<1x4x128xbf16, #tpu.memory_space<vmem>>, %arg3: memref<1x1x4x4xbf16, #tpu.memory_space<vmem>>, %arg4: memref<16x12xbf16, #tpu.memory_space<vmem>>, %arg5: memref<16x1xf32, #tpu.memory_space<vmem>>, %arg6: memref<16x48xbf16, #tpu.memory_space<vmem>>, %arg7: memref<16x1xf32, #tpu.memory_space<vmem>>, %arg8: memref<8x4xbf16, #tpu.memory_space<vmem>>, %arg9: memref<8x1xf32, #tpu.memory_space<vmem>>, %arg10: memref<1x16x128xf32, #tpu.memory_space<vmem>>, %arg11: memref<4x132xbf16, #tpu.memory_space<vmem>>, %arg12: memref<16x130xbf16, #tpu.memory_space<vmem>>, %arg13: memref<12x130xbf16, #tpu.memory_space<vmem>>, %arg14: memref<48x128xbf16, #tpu.memory_space<vmem>>) attributes {dimension_semantics = [#tpu.dimension_semantics<parallel>, #tpu.dimension_semantics<parallel>], iteration_bounds = array<i64: 2, 1>, scalar_prefetch = 0 : i64, scratch_operands = 4 : i64, tpu.core_type = #tpu.core_type<tc>, window_params = [{transform_indices = @transform_0, window_bounds = array<i64: 1, 4, 128>}, {transform_indices = @transform_1, window_bounds = array<i64: 1, 1, 4, 4>}, {pipeline_mode = #tpu.pipeline_mode<synchronous>, transform_indices = @transform_2, window_bounds = array<i64: 16, 12>}, {pipeline_mode = #tpu.pipeline_mode<synchronous>, transform_indices = @transform_3, window_bounds = array<i64: 16, 1>}, {pipeline_mode = #tpu.pipeline_mode<synchronous>, transform_indices = @transform_4, window_bounds = array<i64: 16, 48>}, {pipeline_mode = #tpu.pipeline_mode<synchronous>, transform_indices = @transform_5, window_bounds = array<i64: 16, 1>}, {pipeline_mode = #tpu.pipeline_mode<synchronous>, transform_indices = @transform_6, window_bounds = array<i64: 8, 4>}, {pipeline_mode = #tpu.pipeline_mode<synchronous>, transform_indices = @transform_7, window_bounds = array<i64: 8, 1>}, {transform_indices = @transform_8, window_bounds = array<i64: 1, 16, 128>}]} {
    %c0 = arith.constant 0 : index
    %c0_0 = arith.constant 0 : index
    %c0_1 = arith.constant 0 : index
    %0 = vector.load %arg2[%c0, %c0_0, %c0_1] : memref<1x4x128xbf16, #tpu.memory_space<vmem>>, vector<1x4x128xbf16>
    %1 = vector.shape_cast %0 : vector<1x4x128xbf16> to vector<4x128xbf16>
    %c0_2 = arith.constant 0 : index
    %c0_3 = arith.constant 0 : index
    %c0_4 = arith.constant 0 : index
    %c0_5 = arith.constant 0 : index
    %2 = vector.load %arg3[%c0_2, %c0_3, %c0_4, %c0_5] : memref<1x1x4x4xbf16, #tpu.memory_space<vmem>>, vector<1x1x4x4xbf16>
    %3 = vector.shape_cast %2 : vector<1x1x4x4xbf16> to vector<4x4xbf16>
    %c0_6 = arith.constant 0 : index
    %c0_7 = arith.constant 0 : index
    %4 = vector.load %arg11[%c0_6, %c0_7] : memref<4x132xbf16, #tpu.memory_space<vmem>>, vector<4x4xbf16>
    tpu.vector_store %arg11[%c0_6, %c0_7], %3 {strides = array<i32>} : memref<4x132xbf16, #tpu.memory_space<vmem>>, vector<4x4xbf16>,
    %c0_8 = arith.constant 0 : index
    %c4 = arith.constant 4 : index
    %5 = vector.load %arg11[%c0_8, %c4] : memref<4x132xbf16, #tpu.memory_space<vmem>>, vector<4x128xbf16>
    tpu.vector_store %arg11[%c0_8, %c4], %1 {strides = array<i32>} : memref<4x132xbf16, #tpu.memory_space<vmem>>, vector<4x128xbf16>,
    %c0_9 = arith.constant 0 : index
    %c0_10 = arith.constant 0 : index
    %6 = vector.load %arg11[%c0_9, %c0_10] : memref<4x132xbf16, #tpu.memory_space<vmem>>, vector<4x130xbf16>
    %c0_11 = arith.constant 0 : index
    %c0_12 = arith.constant 0 : index
    %7 = vector.load %arg13[%c0_11, %c0_12] : memref<12x130xbf16, #tpu.memory_space<vmem>>, vector<4x130xbf16>
    tpu.vector_store %arg13[%c0_11, %c0_12], %6 {strides = array<i32>} : memref<12x130xbf16, #tpu.memory_space<vmem>>, vector<4x130xbf16>,
    %c0_13 = arith.constant 0 : index
    %c1 = arith.constant 1 : index
    %8 = vector.load %arg11[%c0_13, %c1] : memref<4x132xbf16, #tpu.memory_space<vmem>>, vector<4x130xbf16>
    %c4_14 = arith.constant 4 : index
    %c0_15 = arith.constant 0 : index
    %9 = vector.load %arg13[%c4_14, %c0_15] : memref<12x130xbf16, #tpu.memory_space<vmem>>, vector<4x130xbf16>
    tpu.vector_store %arg13[%c4_14, %c0_15], %8 {strides = array<i32>} : memref<12x130xbf16, #tpu.memory_space<vmem>>, vector<4x130xbf16>,
    %c0_16 = arith.constant 0 : index
    %c2 = arith.constant 2 : index
    %10 = vector.load %arg11[%c0_16, %c2] : memref<4x132xbf16, #tpu.memory_space<vmem>>, vector<4x130xbf16>
    %c8 = arith.constant 8 : index
    %c0_17 = arith.constant 0 : index
    %11 = vector.load %arg13[%c8, %c0_17] : memref<12x130xbf16, #tpu.memory_space<vmem>>, vector<4x130xbf16>
    tpu.vector_store %arg13[%c8, %c0_17], %10 {strides = array<i32>} : memref<12x130xbf16, #tpu.memory_space<vmem>>, vector<4x130xbf16>,
    %c0_18 = arith.constant 0 : index
    %c0_19 = arith.constant 0 : index
    %12 = vector.load %arg4[%c0_18, %c0_19] : memref<16x12xbf16, #tpu.memory_space<vmem>>, vector<16x12xbf16>
    %c0_20 = arith.constant 0 : index
    %c0_21 = arith.constant 0 : index
    %13 = vector.load %arg13[%c0_20, %c0_21] : memref<12x130xbf16, #tpu.memory_space<vmem>>, vector<12x130xbf16>
    %cst = arith.constant dense<0.000000e+00> : vector<16x130xf32>
    %14 = tpu.matmul %12, %13, %cst {dimension_numbers = #tpu.dot_dimension_numbers<[1], [0], [0], [1], [0, 0, 1, 1], [], []>} : vector<16x12xbf16>, vector<12x130xbf16>, vector<16x130xf32> -> vector<16x130xf32>
    %c0_22 = arith.constant 0 : index
    %c0_23 = arith.constant 0 : index
    %15 = vector.load %arg5[%c0_22, %c0_23] : memref<16x1xf32, #tpu.memory_space<vmem>>, vector<16x1xf32>
    %16 = vector.broadcast %15 : vector<16x1xf32> to vector<16x130xf32>
    %17 = arith.addf %14, %16 : vector<16x130xf32>
    %18 = vector.extract_strided_slice %17 {offsets = [8, 0], sizes = [8, 130], strides = [1, 1]} : vector<16x130xf32> to vector<8x130xf32>
    %19 = vector.extract_strided_slice %17 {offsets = [0, 0], sizes = [8, 130], strides = [1, 1]} : vector<16x130xf32> to vector<8x130xf32>
    %20 = arith.negf %18 : vector<8x130xf32>
    %21 = math.exp %20 : vector<8x130xf32>
    %cst_24 = arith.constant 1.000000e+00 : f32
    %22 = vector.broadcast %cst_24 : f32 to vector<8x130xf32>
    %23 = arith.addf %22, %21 : vector<8x130xf32>
    %24 = arith.divf %22, %23 : vector<8x130xf32>
    %25 = arith.mulf %19, %24 : vector<8x130xf32>
    %26 = arith.truncf %25 : vector<8x130xf32> to vector<8x130xbf16>
    %c0_25 = arith.constant 0 : index
    %c0_26 = arith.constant 0 : index
    %27 = vector.load %arg12[%c0_25, %c0_26] : memref<16x130xbf16, #tpu.memory_space<vmem>>, vector<8x130xbf16>
    tpu.vector_store %arg12[%c0_25, %c0_26], %26 {strides = array<i32>} : memref<16x130xbf16, #tpu.memory_space<vmem>>, vector<8x130xbf16>,
    %28 = arith.truncf %18 : vector<8x130xf32> to vector<8x130xbf16>
    %c8_27 = arith.constant 8 : index
    %c0_28 = arith.constant 0 : index
    %29 = vector.load %arg12[%c8_27, %c0_28] : memref<16x130xbf16, #tpu.memory_space<vmem>>, vector<8x130xbf16>
    tpu.vector_store %arg12[%c8_27, %c0_28], %28 {strides = array<i32>} : memref<16x130xbf16, #tpu.memory_space<vmem>>, vector<8x130xbf16>,
    %c0_i32 = arith.constant 0 : i32
    %30 = arith.cmpi eq, %arg1, %c0_i32 : i32
    %31 = arith.extui %30 : i1 to i32
    %c0_i32_29 = arith.constant 0 : i32
    %32 = arith.cmpi ne, %31, %c0_i32_29 : i32
    scf.if %32 {
      %cst_59 = arith.constant 0.000000e+00 : bf16
      %66 = vector.broadcast %cst_59 : bf16 to vector<16x2xbf16>
      %c0_60 = arith.constant 0 : index
      %c0_61 = arith.constant 0 : index
      %67 = vector.load %arg12[%c0_60, %c0_61] : memref<16x130xbf16, #tpu.memory_space<vmem>>, vector<16x2xbf16>
      tpu.vector_store %arg12[%c0_60, %c0_61], %66 {strides = array<i32>} : memref<16x130xbf16, #tpu.memory_space<vmem>>, vector<16x2xbf16>,
    } else {
    }
    %c0_30 = arith.constant 0 : index
    %c0_31 = arith.constant 0 : index
    %33 = vector.load %arg12[%c0_30, %c0_31] : memref<16x130xbf16, #tpu.memory_space<vmem>>, vector<16x128xbf16>
    %c0_32 = arith.constant 0 : index
    %c0_33 = arith.constant 0 : index
    %34 = vector.load %arg14[%c0_32, %c0_33] : memref<48x128xbf16, #tpu.memory_space<vmem>>, vector<16x128xbf16>
    tpu.vector_store %arg14[%c0_32, %c0_33], %33 {strides = array<i32>} : memref<48x128xbf16, #tpu.memory_space<vmem>>, vector<16x128xbf16>,
    %c0_34 = arith.constant 0 : index
    %c1_35 = arith.constant 1 : index
    %35 = vector.load %arg12[%c0_34, %c1_35] : memref<16x130xbf16, #tpu.memory_space<vmem>>, vector<16x128xbf16>
    %c16 = arith.constant 16 : index
    %c0_36 = arith.constant 0 : index
    %36 = vector.load %arg14[%c16, %c0_36] : memref<48x128xbf16, #tpu.memory_space<vmem>>, vector<16x128xbf16>
    tpu.vector_store %arg14[%c16, %c0_36], %35 {strides = array<i32>} : memref<48x128xbf16, #tpu.memory_space<vmem>>, vector<16x128xbf16>,
    %c0_37 = arith.constant 0 : index
    %c2_38 = arith.constant 2 : index
    %37 = vector.load %arg12[%c0_37, %c2_38] : memref<16x130xbf16, #tpu.memory_space<vmem>>, vector<16x128xbf16>
    %c32 = arith.constant 32 : index
    %c0_39 = arith.constant 0 : index
    %38 = vector.load %arg14[%c32, %c0_39] : memref<48x128xbf16, #tpu.memory_space<vmem>>, vector<16x128xbf16>
    tpu.vector_store %arg14[%c32, %c0_39], %37 {strides = array<i32>} : memref<48x128xbf16, #tpu.memory_space<vmem>>, vector<16x128xbf16>,
    %c0_40 = arith.constant 0 : index
    %c0_41 = arith.constant 0 : index
    %39 = vector.load %arg6[%c0_40, %c0_41] : memref<16x48xbf16, #tpu.memory_space<vmem>>, vector<16x48xbf16>
    %c0_42 = arith.constant 0 : index
    %c0_43 = arith.constant 0 : index
    %40 = vector.load %arg14[%c0_42, %c0_43] : memref<48x128xbf16, #tpu.memory_space<vmem>>, vector<48x128xbf16>
    %cst_44 = arith.constant dense<0.000000e+00> : vector<16x128xf32>
    %41 = tpu.matmul %39, %40, %cst_44 {dimension_numbers = #tpu.dot_dimension_numbers<[1], [0], [0], [1], [0, 0, 1, 1], [], []>} : vector<16x48xbf16>, vector<48x128xbf16>, vector<16x128xf32> -> vector<16x128xf32>
    %c0_45 = arith.constant 0 : index
    %c0_46 = arith.constant 0 : index
    %42 = vector.load %arg7[%c0_45, %c0_46] : memref<16x1xf32, #tpu.memory_space<vmem>>, vector<16x1xf32>
    %43 = vector.broadcast %42 : vector<16x1xf32> to vector<16x128xf32>
    %44 = arith.addf %41, %43 : vector<16x128xf32>
    %45 = vector.extract_strided_slice %44 {offsets = [8, 0], sizes = [8, 128], strides = [1, 1]} : vector<16x128xf32> to vector<8x128xf32>
    %46 = vector.extract_strided_slice %44 {offsets = [0, 0], sizes = [8, 128], strides = [1, 1]} : vector<16x128xf32> to vector<8x128xf32>
    %47 = arith.negf %45 : vector<8x128xf32>
    %48 = math.exp %47 : vector<8x128xf32>
    %cst_47 = arith.constant 1.000000e+00 : f32
    %49 = vector.broadcast %cst_47 : f32 to vector<8x128xf32>
    %50 = arith.addf %49, %48 : vector<8x128xf32>
    %51 = arith.divf %49, %50 : vector<8x128xf32>
    %52 = arith.mulf %46, %51 : vector<8x128xf32>
    %c0_48 = arith.constant 0 : index
    %c0_49 = arith.constant 0 : index
    %53 = vector.load %arg8[%c0_48, %c0_49] : memref<8x4xbf16, #tpu.memory_space<vmem>>, vector<8x4xbf16>
    %cst_50 = arith.constant dense<0.000000e+00> : vector<8x128xf32>
    %54 = tpu.matmul %53, %1, %cst_50 {dimension_numbers = #tpu.dot_dimension_numbers<[1], [0], [0], [1], [0, 0, 1, 1], [], []>} : vector<8x4xbf16>, vector<4x128xbf16>, vector<8x128xf32> -> vector<8x128xf32>
    %c0_51 = arith.constant 0 : index
    %c0_52 = arith.constant 0 : index
    %55 = vector.load %arg9[%c0_51, %c0_52] : memref<8x1xf32, #tpu.memory_space<vmem>>, vector<8x1xf32>
    %56 = vector.broadcast %55 : vector<8x1xf32> to vector<8x128xf32>
    %57 = arith.addf %54, %56 : vector<8x128xf32>
    %58 = arith.addf %52, %57 : vector<8x128xf32>
    %59 = arith.addf %45, %57 : vector<8x128xf32>
    %c0_53 = arith.constant 0 : index
    %c0_54 = arith.constant 0 : index
    %c0_55 = arith.constant 0 : index
    %60 = vector.load %arg10[%c0_53, %c0_54, %c0_55] : memref<1x16x128xf32, #tpu.memory_space<vmem>>, vector<1x8x128xf32>
    %61 = vector.shape_cast %60 : vector<1x8x128xf32> to vector<8x128xf32>
    %62 = vector.shape_cast %58 : vector<8x128xf32> to vector<1x8x128xf32>
    tpu.vector_store %arg10[%c0_53, %c0_54, %c0_55], %62 {strides = array<i32>} : memref<1x16x128xf32, #tpu.memory_space<vmem>>, vector<1x8x128xf32>,
    %c0_56 = arith.constant 0 : index
    %c8_57 = arith.constant 8 : index
    %c0_58 = arith.constant 0 : index
    %63 = vector.load %arg10[%c0_56, %c8_57, %c0_58] : memref<1x16x128xf32, #tpu.memory_space<vmem>>, vector<1x8x128xf32>
    %64 = vector.shape_cast %63 : vector<1x8x128xf32> to vector<8x128xf32>
    %65 = vector.shape_cast %59 : vector<8x128xf32> to vector<1x8x128xf32>
    tpu.vector_store %arg10[%c0_56, %c8_57, %c0_58], %65 {strides = array<i32>} : memref<1x16x128xf32, #tpu.memory_space<vmem>>, vector<1x8x128xf32>,
    return
  }
  func.func @transform_0(%arg0: i32, %arg1: i32) -> (i32, i32, i32) {
    %c0_i32 = arith.constant 0 : i32
    %c0_i32_0 = arith.constant 0 : i32
    return %arg0, %c0_i32, %arg1 : i32, i32, i32
  }
  func.func @transform_1(%arg0: i32, %arg1: i32) -> (i32, i32, i32, i32) {
    %c0_i32 = arith.constant 0 : i32
    %c0_i32_0 = arith.constant 0 : i32
    %c0_i32_1 = arith.constant 0 : i32
    return %arg0, %arg1, %c0_i32, %c0_i32_0 : i32, i32, i32, i32
  }
  func.func @transform_2(%arg0: i32, %arg1: i32) -> (i32, i32) {
    %c0_i32 = arith.constant 0 : i32
    %c0_i32_0 = arith.constant 0 : i32
    %c0_i32_1 = arith.constant 0 : i32
    return %c0_i32, %c0_i32_0 : i32, i32
  }
  func.func @transform_3(%arg0: i32, %arg1: i32) -> (i32, i32) {
    %c0_i32 = arith.constant 0 : i32
    %c0_i32_0 = arith.constant 0 : i32
    %c0_i32_1 = arith.constant 0 : i32
    return %c0_i32, %c0_i32_0 : i32, i32
  }
  func.func @transform_4(%arg0: i32, %arg1: i32) -> (i32, i32) {
    %c0_i32 = arith.constant 0 : i32
    %c0_i32_0 = arith.constant 0 : i32
    %c0_i32_1 = arith.constant 0 : i32
    return %c0_i32, %c0_i32_0 : i32, i32
  }
  func.func @transform_5(%arg0: i32, %arg1: i32) -> (i32, i32) {
    %c0_i32 = arith.constant 0 : i32
    %c0_i32_0 = arith.constant 0 : i32
    %c0_i32_1 = arith.constant 0 : i32
    return %c0_i32, %c0_i32_0 : i32, i32
  }
  func.func @transform_6(%arg0: i32, %arg1: i32) -> (i32, i32) {
    %c0_i32 = arith.constant 0 : i32
    %c0_i32_0 = arith.constant 0 : i32
    %c0_i32_1 = arith.constant 0 : i32
    return %c0_i32, %c0_i32_0 : i32, i32
  }
  func.func @transform_7(%arg0: i32, %arg1: i32) -> (i32, i32) {
    %c0_i32 = arith.constant 0 : i32
    %c0_i32_0 = arith.constant 0 : i32
    %c0_i32_1 = arith.constant 0 : i32
    return %c0_i32, %c0_i32_0 : i32, i32
  }
  func.func @transform_8(%arg0: i32, %arg1: i32) -> (i32, i32, i32) {
    %c0_i32 = arith.constant 0 : i32
    %c0_i32_0 = arith.constant 0 : i32
    return %arg0, %c0_i32, %arg1 : i32, i32, i32
  }
}

</mosaic_0001>

<llo_original>
// kernel: tpu_custom_call.1
$region0: #{tpu_custom_call.1}
  #allocation0 [shape = 'u32[]', space=smem, size = 0x4, offset = 0x4, fixed_abs, tag = 'smem constant byte address 0x4 - core index']
  #allocation1 [shape = 'u32[144,128]{1,0:T(1,128)}', space=vmem, size = 0x12000, scoped, tag = 'internal scratch']
  #allocation2 [shape = 'bf16[4,132]{1,0:T(4,128)(2,1)}', space=vmem, size = 0x800, scoped, tag = 'scratch operand']
  #allocation3 [shape = 'bf16[16,130]{1,0:T(16,128)(2,1)}', space=vmem, size = 0x2000, scoped, tag = 'scratch operand']
  #allocation4 [shape = 'bf16[12,130]{1,0:T(8,128)(2,1)}', space=vmem, size = 0x2000, scoped, tag = 'scratch operand']
  #allocation5 [shape = 'bf16[48,128]{1,0:T(16,128)(2,1)}', space=vmem, size = 0x3000, scoped, tag = 'scratch operand']
  %s0 = inlined_call_operand.vmem [shape: bf16[2,4,128], index: 0, kind: input, shape index: {}]
  %s1 = inlined_call_operand.vmem [shape: bf16[2,1,4,4], index: 1, kind: input, shape index: {}]
  %s2 = inlined_call_operand.vmem [shape: bf16[16,12], index: 2, kind: input, shape index: {}]
  %s3 = inlined_call_operand.vmem [shape: f32[16,1], index: 3, kind: input, shape index: {}]
  %s4 = inlined_call_operand.vmem [shape: bf16[16,48], index: 4, kind: input, shape index: {}]
  %s5 = inlined_call_operand.vmem [shape: f32[16,1], index: 5, kind: input, shape index: {}]
  %s6 = inlined_call_operand.vmem [shape: bf16[8,4], index: 6, kind: input, shape index: {}]
  %s7 = inlined_call_operand.vmem [shape: f32[8,1], index: 7, kind: input, shape index: {}]
  %s8 = inlined_call_operand.hbm [shape: f32[2,16,128], index: 8, kind: output, shape index: {}]
  %s9 = sld [smem:[#allocation0]]
  $region69: #{tpu_custom_call.1} parent=0
    _
  %s11 = ssub.s32 1, %s9
  %s12 = scalar_select 0, %s11, %s9
  $region1: #{tpu_custom_call.1} parent=0
    #allocation6 [shape = 'u8[16384]{0}', space=vmem, size = 0x4000, scoped, tag = 'output window, operand 0']
    #allocation7 [shape = 's32[2]{0}', space=sflag, size = 0x8, scoped, tag = 'scoped memory for tpu_custom_call.1']
    %13 = vsyncpa [#allocation7], 0
    %s14 = scalar_lea.sflag [#allocation7], 1
    %15 = vsyncpa %s14, 0
    loop: start=0, step=1, limit=4
    $region2: #{tpu_custom_call.1} parent=1 // loop_pre_header
      _
    $region3: #{tpu_custom_call.1} parent=1 // loop_header
      %s17 = sphi 0, %s21
      %p18 = scmp.ge.s32.totalorder %s17, 4
      %s24 = sphi 0, %s36
      %s25 = sphi 0, %s32
      %s26 = sphi 0, %s24
      %s27 = sphi 0, %s25
      %s28 = sphi 0, %s26
      %s29 = sphi 0, %s27
      %s41 = sphi 0, %s43
      %s44 = sphi 0, %s41
      %s45 = sphi 0, %s44
      %s61 = sphi 0, %s45
      %s69 = sphi 0, %s71
      %s72 = sphi 0, %s69
      %s73 = sphi 0, %s72
      %s89 = sphi 0, %s73
      %s93 = sphi 0, %s93
      %s95 = sphi 0, %s93
      %s96 = sphi 0, %s95
      %s110 = sphi 0, %s96
      %s114 = sphi 0, %s114
      %s116 = sphi 0, %s114
      %s117 = sphi 0, %s116
      %s131 = sphi 0, %s117
      %s135 = sphi 0, %s135
      %s137 = sphi 0, %s135
      %s138 = sphi 0, %s137
      %s152 = sphi 0, %s138
      %s156 = sphi 0, %s156
      %s158 = sphi 0, %s156
      %s159 = sphi 0, %s158
      %s173 = sphi 0, %s159
      %s177 = sphi 0, %s177
      %s179 = sphi 0, %s177
      %s180 = sphi 0, %s179
      %s194 = sphi 0, %s180
      %s198 = sphi 0, %s198
      %s200 = sphi 0, %s198
      %s201 = sphi 0, %s200
      %s215 = sphi 0, %s201
      %s223 = sphi 0, %s225
      %s226 = sphi 0, %s223
      %s227 = sphi 0, %s226
      %s243 = sphi 0, %s227
    $region4: #{tpu_custom_call.1} parent=1 // loop_header_branch
      %20 = sbr.rel (%p18) target = $region8
    $region5: #{tpu_custom_call.1} parent=1 // loop_body
      %s22 = ssub.s32 %s17, 1
      %s23 = ssub.s32 %s17, 2
      %s30 = sadd.s32 1, %s25
      %p31 = scmp.ge.s32.totalorder %s30, 1
      %s32 = scalar_select %p31, 0, %s30
      %s33 = sadd.s32 1, %s24
      %s34 = scalar_select %p31, %s33, %s24
      %p35 = scmp.ge.s32.totalorder %s34, 2
      %s36 = scalar_select %p35, 0, %s34
      %s37 = ssub.s32 %s24, %s36
      %s38 = ssub.s32 %s25, %s32
      %s39 = sor.u32 %s37, %s38
      %p40 = scmp.eq.s32.totalorder %s39, 0
      %s42 = sadd.s32 %s41, 1
      %s43 = scalar_select %p40, %s41, %s42
      %p46 = pneg %p40
      %p47 = scmp.eq.s32.totalorder %s17, 1
      %p48 = por %p46, %p47
      %p49 = scmp.ne.s32.totalorder %s41, %s44
      %p50 = scmp.eq.s32.totalorder %s17, 0
      %p51 = por %p49, %p50
      %p52 = scmp.ne.s32.totalorder %s41, %s44
      %p53 = scmp.eq.s32.totalorder %s22, 1
      %p54 = por %p52, %p53
      %p55 = scmp.ne.s32.totalorder %s44, %s45
      %p56 = scmp.eq.s32.totalorder %s22, 0
      %p57 = por %p55, %p56
      %p58 = scmp.ne.s32.totalorder %s44, %s45
      %p59 = scmp.eq.s32.totalorder %s23, 1
      %p60 = por %p58, %p59
      %p62 = scmp.ne.s32.totalorder %s45, %s61
      %p63 = scmp.eq.s32.totalorder %s23, 0
      %p64 = por %p62, %p63
      %s65 = ssub.s32 %s24, %s36
      %s66 = ssub.s32 %s25, %s32
      %s67 = sor.u32 %s65, %s66
      %p68 = scmp.eq.s32.totalorder %s67, 0
      %s70 = sadd.s32 %s69, 1
      %s71 = scalar_select %p68, %s69, %s70
      %p74 = pneg %p68
      %p75 = scmp.eq.s32.totalorder %s17, 1
      %p76 = por %p74, %p75
      %p77 = scmp.ne.s32.totalorder %s69, %s72
      %p78 = scmp.eq.s32.totalorder %s17, 0
      %p79 = por %p77, %p78
      %p80 = scmp.ne.s32.totalorder %s69, %s72
      %p81 = scmp.eq.s32.totalorder %s22, 1
      %p82 = por %p80, %p81
      %p83 = scmp.ne.s32.totalorder %s72, %s73
      %p84 = scmp.eq.s32.totalorder %s22, 0
      %p85 = por %p83, %p84
      %p86 = scmp.ne.s32.totalorder %s72, %s73
      %p87 = scmp.eq.s32.totalorder %s23, 1
      %p88 = por %p86, %p87
      %p90 = scmp.ne.s32.totalorder %s73, %s89
      %p91 = scmp.eq.s32.totalorder %s23, 0
      %p92 = por %p90, %p91
      %s94 = sadd.s32 %s93, 1
      %p97 = scmp.eq.s32.totalorder %s17, 1
      %p98 = scmp.ne.s32.totalorder %s93, %s95
      %p99 = scmp.eq.s32.totalorder %s17, 0
      %p100 = por %p98, %p99
      %p101 = scmp.ne.s32.totalorder %s93, %s95
      %p102 = scmp.eq.s32.totalorder %s22, 1
      %p103 = por %p101, %p102
      %p104 = scmp.ne.s32.totalorder %s95, %s96
      %p105 = scmp.eq.s32.totalorder %s22, 0
      %p106 = por %p104, %p105
      %p107 = scmp.ne.s32.totalorder %s95, %s96
      %p108 = scmp.eq.s32.totalorder %s23, 1
      %p109 = por %p107, %p108
      %p111 = scmp.ne.s32.totalorder %s96, %s110
      %p112 = scmp.eq.s32.totalorder %s23, 0
      %p113 = por %p111, %p112
      %s115 = sadd.s32 %s114, 1
      %p118 = scmp.eq.s32.totalorder %s17, 1
      %p119 = scmp.ne.s32.totalorder %s114, %s116
      %p120 = scmp.eq.s32.totalorder %s17, 0
      %p121 = por %p119, %p120
      %p122 = scmp.ne.s32.totalorder %s114, %s116
      %p123 = scmp.eq.s32.totalorder %s22, 1
      %p124 = por %p122, %p123
      %p125 = scmp.ne.s32.totalorder %s116, %s117
      %p126 = scmp.eq.s32.totalorder %s22, 0
      %p127 = por %p125, %p126
      %p128 = scmp.ne.s32.totalorder %s116, %s117
      %p129 = scmp.eq.s32.totalorder %s23, 1
      %p130 = por %p128, %p129
      %p132 = scmp.ne.s32.totalorder %s117, %s131
      %p133 = scmp.eq.s32.totalorder %s23, 0
      %p134 = por %p132, %p133
      %s136 = sadd.s32 %s135, 1
      %p139 = scmp.eq.s32.totalorder %s17, 1
      %p140 = scmp.ne.s32.totalorder %s135, %s137
      %p141 = scmp.eq.s32.totalorder %s17, 0
      %p142 = por %p140, %p141
      %p143 = scmp.ne.s32.totalorder %s135, %s137
      %p144 = scmp.eq.s32.totalorder %s22, 1
      %p145 = por %p143, %p144
      %p146 = scmp.ne.s32.totalorder %s137, %s138
      %p147 = scmp.eq.s32.totalorder %s22, 0
      %p148 = por %p146, %p147
      %p149 = scmp.ne.s32.totalorder %s137, %s138
      %p150 = scmp.eq.s32.totalorder %s23, 1
      %p151 = por %p149, %p150
      %p153 = scmp.ne.s32.totalorder %s138, %s152
      %p154 = scmp.eq.s32.totalorder %s23, 0
      %p155 = por %p153, %p154
      %s157 = sadd.s32 %s156, 1
      %p160 = scmp.eq.s32.totalorder %s17, 1
      %p161 = scmp.ne.s32.totalorder %s156, %s158
      %p162 = scmp.eq.s32.totalorder %s17, 0
      %p163 = por %p161, %p162
      %p164 = scmp.ne.s32.totalorder %s156, %s158
      %p165 = scmp.eq.s32.totalorder %s22, 1
      %p166 = por %p164, %p165
      %p167 = scmp.ne.s32.totalorder %s158, %s159
      %p168 = scmp.eq.s32.totalorder %s22, 0
      %p169 = por %p167, %p168
      %p170 = scmp.ne.s32.totalorder %s158, %s159
      %p171 = scmp.eq.s32.totalorder %s23, 1
      %p172 = por %p170, %p171
      %p174 = scmp.ne.s32.totalorder %s159, %s173
      %p175 = scmp.eq.s32.totalorder %s23, 0
      %p176 = por %p174, %p175
      %s178 = sadd.s32 %s177, 1
      %p181 = scmp.eq.s32.totalorder %s17, 1
      %p182 = scmp.ne.s32.totalorder %s177, %s179
      %p183 = scmp.eq.s32.totalorder %s17, 0
      %p184 = por %p182, %p183
      %p185 = scmp.ne.s32.totalorder %s177, %s179
      %p186 = scmp.eq.s32.totalorder %s22, 1
      %p187 = por %p185, %p186
      %p188 = scmp.ne.s32.totalorder %s179, %s180
      %p189 = scmp.eq.s32.totalorder %s22, 0
      %p190 = por %p188, %p189
      %p191 = scmp.ne.s32.totalorder %s179, %s180
      %p192 = scmp.eq.s32.totalorder %s23, 1
      %p193 = por %p191, %p192
      %p195 = scmp.ne.s32.totalorder %s180, %s194
      %p196 = scmp.eq.s32.totalorder %s23, 0
      %p197 = por %p195, %p196
      %s199 = sadd.s32 %s198, 1
      %p202 = scmp.eq.s32.totalorder %s17, 1
      %p203 = scmp.ne.s32.totalorder %s198, %s200
      %p204 = scmp.eq.s32.totalorder %s17, 0
      %p205 = por %p203, %p204
      %p206 = scmp.ne.s32.totalorder %s198, %s200
      %p207 = scmp.eq.s32.totalorder %s22, 1
      %p208 = por %p206, %p207
      %p209 = scmp.ne.s32.totalorder %s200, %s201
      %p210 = scmp.eq.s32.totalorder %s22, 0
      %p211 = por %p209, %p210
      %p212 = scmp.ne.s32.totalorder %s200, %s201
      %p213 = scmp.eq.s32.totalorder %s23, 1
      %p214 = por %p212, %p213
      %p216 = scmp.ne.s32.totalorder %s201, %s215
      %p217 = scmp.eq.s32.totalorder %s23, 0
      %p218 = por %p216, %p217
      %s219 = ssub.s32 %s24, %s36
      %s220 = ssub.s32 %s25, %s32
      %s221 = sor.u32 %s219, %s220
      %p222 = scmp.eq.s32.totalorder %s221, 0
      %s224 = sadd.s32 %s223, 1
      %s225 = scalar_select %p222, %s223, %s224
      %p228 = pneg %p222
      %p229 = scmp.eq.s32.totalorder %s17, 1
      %p230 = por %p228, %p229
      %p231 = scmp.ne.s32.totalorder %s223, %s226
      %p232 = scmp.eq.s32.totalorder %s17, 0
      %p233 = por %p231, %p232
      %p234 = scmp.ne.s32.totalorder %s223, %s226
      %p235 = scmp.eq.s32.totalorder %s22, 1
      %p236 = por %p234, %p235
      %p237 = scmp.ne.s32.totalorder %s226, %s227
      %p238 = scmp.eq.s32.totalorder %s22, 0
      %p239 = por %p237, %p238
      %p240 = scmp.ne.s32.totalorder %s226, %s227
      %p241 = scmp.eq.s32.totalorder %s23, 1
      %p242 = por %p240, %p241
      %p244 = scmp.ne.s32.totalorder %s227, %s243
      %p245 = scmp.eq.s32.totalorder %s23, 0
      %p246 = por %p244, %p245
      %p247 = scmp.le.s32.totalorder 1, %s17
      %p248 = scmp.lt.s32.totalorder %s17, 3
      %p249 = pnand %p247, %p248
      %p250 = pneg %p249
      // Predicated region
      $region9: #{tpu_custom_call.1} parent=5 // pred_check
        _
      $region10: #{tpu_custom_call.1} parent=5 // pred_check_branch
        %252 = sbr.rel (%p249) target = $region12
      $region11: #{tpu_custom_call.1} parent=5 // pred_region
        %s253 = ssub.s32 %s17, 1
        // Predicated region
        $region13: #{tpu_custom_call.1} parent=11 // pred_check
          %p254 = pneg %p106
        $region14: #{tpu_custom_call.1} parent=11 // pred_check_branch
          %256 = sbr.rel (%p254) target = $region16
        $region15: #{tpu_custom_call.1} parent=11 // pred_region
          _
        $region16: #{tpu_custom_call.1} parent=11 // pred_fallthru
          _
        // Predicated region
        $region17: #{tpu_custom_call.1} parent=11 // pred_check
          %p257 = pneg %p127
        $region18: #{tpu_custom_call.1} parent=11 // pred_check_branch
          %259 = sbr.rel (%p257) target = $region20
        $region19: #{tpu_custom_call.1} parent=11 // pred_region
          _
        $region20: #{tpu_custom_call.1} parent=11 // pred_fallthru
          _
        // Predicated region
        $region21: #{tpu_custom_call.1} parent=11 // pred_check
          %p260 = pneg %p148
        $region22: #{tpu_custom_call.1} parent=11 // pred_check_branch
          %262 = sbr.rel (%p260) target = $region24
        $region23: #{tpu_custom_call.1} parent=11 // pred_region
          _
        $region24: #{tpu_custom_call.1} parent=11 // pred_fallthru
          _
        // Predicated region
        $region25: #{tpu_custom_call.1} parent=11 // pred_check
          %p263 = pneg %p169
        $region26: #{tpu_custom_call.1} parent=11 // pred_check_branch
          %265 = sbr.rel (%p263) target = $region28
        $region27: #{tpu_custom_call.1} parent=11 // pred_region
          _
        $region28: #{tpu_custom_call.1} parent=11 // pred_fallthru
          _
        // Predicated region
        $region29: #{tpu_custom_call.1} parent=11 // pred_check
          %p266 = pneg %p190
        $region30: #{tpu_custom_call.1} parent=11 // pred_check_branch
          %268 = sbr.rel (%p266) target = $region32
        $region31: #{tpu_custom_call.1} parent=11 // pred_region
          _
        $region32: #{tpu_custom_call.1} parent=11 // pred_fallthru
          _
        // Predicated region
        $region33: #{tpu_custom_call.1} parent=11 // pred_check
          %p269 = pneg %p211
        $region34: #{tpu_custom_call.1} parent=11 // pred_check_branch
          %271 = sbr.rel (%p269) target = $region36
        $region35: #{tpu_custom_call.1} parent=11 // pred_region
          _
        $region36: #{tpu_custom_call.1} parent=11 // pred_fallthru
          _
      $region12: #{tpu_custom_call.1} parent=5 // pred_fallthru
        _
      %p272 = scmp.lt.s32.totalorder %s17, 2
      // Predicated region
      $region37: #{tpu_custom_call.1} parent=5 // pred_check
        %p273 = pneg %p272
      $region38: #{tpu_custom_call.1} parent=5 // pred_check_branch
        %275 = sbr.rel (%p273) target = $region40
      $region39: #{tpu_custom_call.1} parent=5 // pred_region
        // Predicated region
        $region41: #{tpu_custom_call.1} parent=39 // pred_check
          %p276 = pneg %p51
        $region42: #{tpu_custom_call.1} parent=39 // pred_check_branch
          %278 = sbr.rel (%p276) target = $region44
        $region43: #{tpu_custom_call.1} parent=39 // pred_region
          %p279 = scmp.lt.s32.totalorder %s24, 1
          %s280 = scalar_select %p279, %s24, 1
          %p281 = scmp.lt.s32.totalorder %s25, 0
          %s282 = scalar_select %p281, %s25, 0
          %s283 = sadd.s32 %s282, %s280
          %s284 = smul.addr %s283, 2
          %s285 = scalar_lea.vmem %s0, %s284
        $region44: #{tpu_custom_call.1} parent=39 // pred_fallthru
          _
        // Predicated region
        $region45: #{tpu_custom_call.1} parent=39 // pred_check
          %p286 = pneg %p79
        $region46: #{tpu_custom_call.1} parent=39 // pred_check_branch
          %288 = sbr.rel (%p286) target = $region48
        $region47: #{tpu_custom_call.1} parent=39 // pred_region
          %p289 = scmp.lt.s32.totalorder %s24, 1
          %s290 = scalar_select %p289, %s24, 1
          %p291 = scmp.lt.s32.totalorder %s25, 0
          %s292 = scalar_select %p291, %s25, 0
          %s293 = sadd.s32 %s292, %s290
          %s294 = smul.addr %s293, 2
          %s295 = scalar_lea.vmem %s1, %s294
        $region48: #{tpu_custom_call.1} parent=39 // pred_fallthru
          _
      $region40: #{tpu_custom_call.1} parent=5 // pred_fallthru
        _
      %p296 = scmp.le.s32.totalorder 1, %s17
      %p297 = scmp.lt.s32.totalorder %s17, 3
      %p298 = pnand %p296, %p297
      %p299 = pneg %p298
      // Predicated region
      $region49: #{tpu_custom_call.1} parent=5 // pred_check
        _
      $region50: #{tpu_custom_call.1} parent=5 // pred_check_branch
        %301 = sbr.rel (%p298) target = $region52
      $region51: #{tpu_custom_call.1} parent=5 // pred_region
        %s302 = ssub.s32 %s17, 1
        %p303 = scmp.lt.s32.totalorder %s26, 1
        %s304 = scalar_select %p303, %s26, 1
        %p305 = scmp.lt.s32.totalorder %s27, 0
        %s306 = scalar_select %p305, %s27, 0
        %s307 = sadd.s32 %s306, %s304
        %s308 = smul.addr %s307, 2
        %s309 = scalar_lea.vmem %s0, %s308
        %p310 = pneg %p57
        %p311 = pneg %p54
        %p312 = scmp.lt.s32.totalorder %s26, 1
        %s313 = scalar_select %p312, %s26, 1
        %p314 = scmp.lt.s32.totalorder %s27, 0
        %s315 = scalar_select %p314, %s27, 0
        %s316 = sadd.s32 %s315, %s313
        %s317 = smul.addr %s316, 2
        %s318 = scalar_lea.vmem %s1, %s317
        %p319 = pneg %p85
        %p320 = pneg %p82
        %p321 = pneg %p106
        %p322 = pneg %p103
        %p323 = pneg %p127
        %p324 = pneg %p124
        %p325 = pneg %p148
        %p326 = pneg %p145
        %p327 = pneg %p169
        %p328 = pneg %p166
        %p329 = pneg %p190
        %p330 = pneg %p187
        %p331 = pneg %p211
        %p332 = pneg %p208
        %p333 = pneg %p239
        %p334 = pneg %p236
        %s335 = sand.u32 %s226, 1
        %s336 = scalar_lea.sflag [#allocation7], %s335
        %s337 = sand.u32 %s226, 1
        %s338 = smul.addr %s337, 16
        %s339 = scalar_lea.vmem [#allocation6], %s338
        %p340 = scmp.lt.s32.totalorder %s26, 1
        %s341 = scalar_select %p340, %s26, 1
        %p342 = scmp.lt.s32.totalorder %s27, 0
        %s343 = scalar_select %p342, %s27, 0
        %s344 = sadd.s32 %s343, %s341
        %s345 = smul.addr %s344, 2
        %s346 = scalar_lea.vmem %s0, %s345
        %p347 = scmp.lt.s32.totalorder %s26, 1
        %s348 = scalar_select %p347, %s26, 1
        %p349 = scmp.lt.s32.totalorder %s27, 0
        %s350 = scalar_select %p349, %s27, 0
        %s351 = sadd.s32 %s350, %s348
        %s352 = smul.addr %s351, 2
        %s353 = scalar_lea.vmem %s1, %s352
        %v355 = vld [vmem:[%s346] sm:$0x3]
        %v356 = vld [vmem:[%s353] sm:$0x3]
        %vm357 = vcmask 25600
        %358 = vst.msk [vmem:[#allocation2] sm:$0x3] %vm357, %v356
        %360 = vrot.lane.b32.xlu0 %v355, 4
        %v361 = vpop.permute.xlu0 %360
        %v362 = vrot.slane %v361, 6
        %vm363 = vcmask 31744
        %v364 = vsel %vm363, %v362, %v361
        %vm366 = vcmask 1041440
        %vm367 = vcmask 27650
        %vm368 = vmor %vm367, %vm366
        %369 = vst.msk [vmem:[#allocation2] sm:$0xf] %vm368, %v364
        %v370 = vld [vmem:[#allocation2] sm:$0xf]
        %v373 = vunpack.c.l.s4 1983009808
        %v374 = vunpack.c.0.s8 %v373
        %v375 = vlaneseq
        %v376 = vshrl.u32 %v375, 7
        %v377 = vsub.s32 %v374, %v376
        %v378 = vrot.slane %v370, %v377
        %vm380 = vcmask 1041408
        %vm381 = vcmask 13316
        %vm382 = vmor %vm381, %vm380
        %383 = vst.msk [vmem:[#allocation4] sm:$0x33] %vm382, %v378
        %v384 = vld [vmem:[#allocation2] sm:$0xf]
        %v386 = vcombine.low %v384, %v384
        %v388 = vunpack.c.l.s4 1983009808
        %v389 = vunpack.c.0.s8 %v388
        %v390 = vlaneseq
        %v391 = vshrl.u32 %v390, 7
        %v392 = vsub.s32 %v389, %v391
        %v393 = vrot.slane %v386, %v392
        %394 = vrot.lane.b32.xlu0 %v393, 127
        %v395 = vpop.permute.xlu0 %394
        %v396 = vrot.slane %v395, 4
        %vm397 = vcmask 1039360
        %v398 = vsel %vm397, %v395, %v396
        %vm400 = vcmask 1043458
        %vm401 = vcmask 15366
        %vm402 = vmor %vm401, %vm400
        %403 = vst.msk [vmem:[#allocation4] sm:$0xcc] %vm402, %v398
        %v404 = vld [vmem:[#allocation2] sm:$0xf]
        %v407 = vunpack.c.l.s4 1983009808
        %v408 = vunpack.c.0.s8 %v407
        %v409 = vlaneseq
        %v410 = vshrl.u32 %v409, 7
        %v411 = vsub.s32 %v408, %v410
        %v412 = vrot.slane %v404, %v411
        %413 = vrot.lane.b32.xlu0 %v412, 126
        %v414 = vpop.permute.xlu0 %413
        %v415 = vrot.slane %v414, 4
        %vm416 = vcmask 1031168
        %v417 = vsel %vm416, %v414, %v415
        %419 = vst.msk [vmem:[#allocation4 + $0x8] sm:$0x33] %vm382, %v417
        %v420 = vld [vmem:[%s2] sm:$0xf]
        %v421 = vld [vmem:[%s2 + $0x4] sm:$0xf]
        %v422 = vld [vmem:[#allocation4] sm:$0xff]
        %v423 = vld [vmem:[#allocation4 + $0x8] sm:$0x33]
        %v424 = vld [vmem:[%s3] sm:$0xff]
        %v425 = vld [vmem:[%s3 + $0x8] sm:$0xff]
        %427 = vset.pattern.permute.xlu0 0
        %428 = vperm.xlu0 %427, %v424
        %v429 = vpop.permute.xlu0 %428
        %432 = vset.pattern.permute.xlu0 0
        %433 = vperm.xlu0 %432, %v425
        %v434 = vpop.permute.xlu0 %433
        %v438 = vunpack.c.l.b16 %v420
        %v439 = vunpack.c.l.b16 %v421
        %v440 = vpack.c.b16 %v439, %v438
        %v443 = vunpack.c.l.b16 %v422
        %v444 = vunpack.c.h.b16 %v422
        %v445 = vunpack.c.l.b16 %v423
        %v446 = vunpack.c.h.b16 %v423
        %v447 = vpack.c.b16 %v445, %v443
        %v448 = vpack.c.b16 %v446, %v444
        %vm449 = vcmask 97280
        %v451 = vsel %vm449, %v440, 0
        %vm453 = vcmask 1045504
        %v455 = vsel %vm453, %v447, 0
        %v458 = vsel %vm453, %v448, 0
        %460 = vmatprep.subr.bf16.mxu0 %v458
        %461 = vmatpush1.bf16.msra.mxu0 %v455
        %462 = vmatprep.subr.bf16.mxu0 0
        %463 = vmatpush1.bf16.msra.mxu0 0
        %464 = vmatprep.subr.bf16.mxu0 0
        %465 = vmatpush1.bf16.msra.mxu0 0
        %466 = vmatprep.subr.bf16.mxu0 0
        %467 = vmatpush1.bf16.msra.mxu0 0
        %468 = vmatprep.subr.bf16.mxu0 0
        %469 = vmatpush1.bf16.msra.mxu0 0
        %470 = vmatprep.subr.bf16.mxu0 0
        %471 = vmatpush1.bf16.msra.mxu0 0
        %472 = vmatprep.subr.bf16.mxu0 0
        %473 = vmatpush1.bf16.msra.mxu0 0
        %474 = vmatprep.subr.bf16.mxu0 0
        %475 = vmatpush1.bf16.msra.mxu0 0
        %476 = vmatprep.subr.bf16.mxu0 0
        %477 = vmatpush1.bf16.msra.mxu0 0
        %478 = vmatprep.subr.bf16.mxu0 0
        %479 = vmatpush1.bf16.msra.mxu0 0
        %480 = vmatprep.subr.bf16.mxu0 0
        %481 = vmatpush1.bf16.msra.mxu0 0
        %482 = vmatprep.subr.bf16.mxu0 0
        %483 = vmatpush1.bf16.msra.mxu0 0
        %484 = vmatprep.subr.bf16.mxu0 0
        %485 = vmatpush1.bf16.msra.mxu0 0
        %486 = vmatprep.subr.bf16.mxu0 0
        %487 = vmatpush1.bf16.msra.mxu0 0
        %488 = vmatprep.subr.bf16.mxu0 0
        %489 = vmatpush1.bf16.msra.mxu0 0
        %490 = vmatprep.subr.bf16.mxu0 0
        %491 = vmatpush1.bf16.msra.mxu0 0
        %492 = vmatprep.mubr.bf16.mxu0 0
        %493 = vmatmul.mubr.bf16.gmra.mrb[0].mxu0 %v451
        %v494 = vpop.f32.mrb[0].mxu0
        %v495 = vadd.f32 %v429, %v494
        %v496 = vpop.f32.mrb[0].mxu0
        %v497 = vadd.f32 %v429, %v496
        %v498 = vpop.f32.mrb[0].mxu0
        %v499 = vadd.f32 %v434, %v498
        %v500 = vpop.f32.mrb[0].mxu0
        %v501 = vadd.f32 %v434, %v500
        %502 = vdwg.mxu0
        %v503 = vxor.u32 %v499, 2147483648
        %v504 = vxor.u32 %v501, 2147483648
        %v505 = vmul.f32 %v503, 1.442695
        %v506 = vpow.pop %v505
        %v507 = vmul.f32 %v504, 1.442695
        %v508 = vpow.pop %v507
        %v509 = vadd.f32 %v506, 1.0
        %v510 = vadd.f32 %v508, 1.0
        %v511 = vrcp.pop %v509
        %v512 = vmul.f32 1.0, %v511
        %v513 = vrcp.pop %v510
        %v514 = vmul.f32 1.0, %v513
        %v515 = vmul.f32 %v495, %v512
        %v516 = vmul.f32 %v497, %v514
        %v517 = vpack.c.bf16 %v515, %v515
        %v518 = vpack.c.bf16 %v516, %v516
        %519 = vst [vmem:[#allocation3] sm:$0xf] %v517
        %vm520 = vcmask 11264
        %521 = vst.msk [vmem:[#allocation3 + $0x8] sm:$0xf] %vm520, %v518
        %v522 = vpack.c.bf16 %v499, %v499
        %v523 = vpack.c.bf16 %v501, %v501
        %v526 = vrot.slane %v522, 4
        %v527 = vrot.slane %v523, 4
        %530 = vst [vmem:[#allocation3] sm:$0xf0] %v526
        %vm531 = vcmask 15364
        %532 = vst.msk [vmem:[#allocation3 + $0x8] sm:$0xf0] %vm531, %v527
        %p533 = scmp.eq.s32.totalorder %s27, 0
        // Predicated region
        $region53: #{tpu_custom_call.1} parent=51 // pred_check
          %p534 = pneg %p533
        $region54: #{tpu_custom_call.1} parent=51 // pred_check_branch
          %536 = sbr.rel (%p534) target = $region56
        $region55: #{tpu_custom_call.1} parent=51 // pred_region
          %vm537 = vcmask 15360
          %538 = vst.msk [vmem:[#allocation3] sm:$0xff] %vm537, 0
        $region56: #{tpu_custom_call.1} parent=51 // pred_fallthru
          _
        %v539 = vld [vmem:[#allocation3] sm:$0xff]
        %540 = vst [vmem:[#allocation5] sm:$0xff] %v539
        %v541 = vld [vmem:[#allocation3] sm:$0xff]
        %v542 = vld [vmem:[#allocation3 + $0x8] sm:$0xff]
        %545 = vrot.lane.b32.xlu0 %v541, 127
        %v546 = vpop.permute.xlu0 %545
        %547 = vrot.lane.b32.xlu0 %v542, 127
        %v548 = vpop.permute.xlu0 %547
        %v549 = vsel %vm397, %v546, %v548
        %551 = vst [vmem:[#allocation5 + $0x8] sm:$0xff] %v549
        %v552 = vld [vmem:[#allocation3] sm:$0xff]
        %v553 = vld [vmem:[#allocation3 + $0x8] sm:$0xff]
        %556 = vrot.lane.b32.xlu0 %v552, 126
        %v557 = vpop.permute.xlu0 %556
        %558 = vrot.lane.b32.xlu0 %v553, 126
        %v559 = vpop.permute.xlu0 %558
        %v560 = vsel %vm416, %v557, %v559
        %562 = vst [vmem:[#allocation5 + $0x10] sm:$0xff] %v560
        %v563 = vld [vmem:[%s4] sm:$0xf]
        %v564 = vld [vmem:[%s4 + $0x4] sm:$0xf]
        %v565 = vld [vmem:[#allocation5] sm:$0xff]
        %v566 = vld [vmem:[#allocation5 + $0x8] sm:$0xff]
        %v567 = vld [vmem:[#allocation5 + $0x10] sm:$0xff]
        %v568 = vld [vmem:[%s5] sm:$0xff]
        %v569 = vld [vmem:[%s5 + $0x8] sm:$0xff]
        %571 = vset.pattern.permute.xlu0 0
        %572 = vperm.xlu0 %571, %v568
        %v573 = vpop.permute.xlu0 %572
        %576 = vset.pattern.permute.xlu0 0
        %577 = vperm.xlu0 %576, %v569
        %v578 = vpop.permute.xlu0 %577
        %v582 = vunpack.c.l.b16 %v563
        %v583 = vunpack.c.l.b16 %v564
        %v584 = vpack.c.b16 %v583, %v582
        %vm585 = vcmask 392192
        %v587 = vsel %vm585, %v584, 0
        %589 = vmatprep.subr.bf16.mxu0 0
        %590 = vmatpush1.bf16.msra.mxu0 %v565
        %591 = vmatprep.subr.bf16.mxu0 0
        %592 = vmatpush1.bf16.msra.mxu0 %v566
        %593 = vmatprep.subr.bf16.mxu0 0
        %594 = vmatpush1.bf16.msra.mxu0 %v567
        %595 = vmatprep.subr.bf16.mxu0 0
        %596 = vmatpush1.bf16.msra.mxu0 0
        %597 = vmatprep.subr.bf16.mxu0 0
        %598 = vmatpush1.bf16.msra.mxu0 0
        %599 = vmatprep.subr.bf16.mxu0 0
        %600 = vmatpush1.bf16.msra.mxu0 0
        %601 = vmatprep.subr.bf16.mxu0 0
        %602 = vmatpush1.bf16.msra.mxu0 0
        %603 = vmatprep.subr.bf16.mxu0 0
        %604 = vmatpush1.bf16.msra.mxu0 0
        %605 = vmatprep.subr.bf16.mxu0 0
        %606 = vmatpush1.bf16.msra.mxu0 0
        %607 = vmatprep.subr.bf16.mxu0 0
        %608 = vmatpush1.bf16.msra.mxu0 0
        %609 = vmatprep.subr.bf16.mxu0 0
        %610 = vmatpush1.bf16.msra.mxu0 0
        %611 = vmatprep.subr.bf16.mxu0 0
        %612 = vmatpush1.bf16.msra.mxu0 0
        %613 = vmatprep.subr.bf16.mxu0 0
        %614 = vmatpush1.bf16.msra.mxu0 0
        %615 = vmatprep.subr.bf16.mxu0 0
        %616 = vmatpush1.bf16.msra.mxu0 0
        %617 = vmatprep.subr.bf16.mxu0 0
        %618 = vmatpush1.bf16.msra.mxu0 0
        %619 = vmatprep.subr.bf16.mxu0 0
        %620 = vmatpush1.bf16.msra.mxu0 0
        %621 = vmatprep.mubr.bf16.mxu0 0
        %622 = vmatmul.mubr.bf16.gmra.mrb[0].mxu0 %v587
        %v623 = vpop.f32.mrb[0].mxu0
        %v624 = vadd.f32 %v573, %v623
        %v625 = vpop.f32.mrb[0].mxu0
        %v626 = vpop.f32.mrb[0].mxu0
        %v627 = vadd.f32 %v578, %v626
        %v628 = vpop.f32.mrb[0].mxu0
        %629 = vdwg.mxu0
        %v630 = vxor.u32 %v627, 2147483648
        %v631 = vmul.f32 %v630, 1.442695
        %v632 = vpow.pop %v631
        %v633 = vadd.f32 %v632, 1.0
        %v634 = vrcp.pop %v633
        %v635 = vmul.f32 1.0, %v634
        %v636 = vmul.f32 %v624, %v635
        %v637 = vld [vmem:[%s6] sm:$0xf]
        %v638 = vld [vmem:[%s7] sm:$0xff]
        %640 = vset.pattern.permute.xlu0 0
        %641 = vperm.xlu0 %640, %v638
        %v642 = vpop.permute.xlu0 %641
        %vm644 = vcmask 31744
        %v646 = vsel %vm644, %v637, 0
        %v649 = vsel %vm380, %v355, 0
        %651 = vmatprep.subr.bf16.mxu0 0
        %652 = vmatpush1.bf16.msra.mxu0 %v649
        %653 = vmatprep.subr.bf16.mxu0 0
        %654 = vmatpush1.bf16.msra.mxu0 0
        %655 = vmatprep.subr.bf16.mxu0 0
        %656 = vmatpush1.bf16.msra.mxu0 0
        %657 = vmatprep.subr.bf16.mxu0 0
        %658 = vmatpush1.bf16.msra.mxu0 0
        %659 = vmatprep.subr.bf16.mxu0 0
        %660 = vmatpush1.bf16.msra.mxu0 0
        %661 = vmatprep.subr.bf16.mxu0 0
        %662 = vmatpush1.bf16.msra.mxu0 0
        %663 = vmatprep.subr.bf16.mxu0 0
        %664 = vmatpush1.bf16.msra.mxu0 0
        %665 = vmatprep.subr.bf16.mxu0 0
        %666 = vmatpush1.bf16.msra.mxu0 0
        %667 = vmatprep.subr.bf16.mxu0 0
        %668 = vmatpush1.bf16.msra.mxu0 0
        %669 = vmatprep.subr.bf16.mxu0 0
        %670 = vmatpush1.bf16.msra.mxu0 0
        %671 = vmatprep.subr.bf16.mxu0 0
        %672 = vmatpush1.bf16.msra.mxu0 0
        %673 = vmatprep.subr.bf16.mxu0 0
        %674 = vmatpush1.bf16.msra.mxu0 0
        %675 = vmatprep.subr.bf16.mxu0 0
        %676 = vmatpush1.bf16.msra.mxu0 0
        %677 = vmatprep.subr.bf16.mxu0 0
        %678 = vmatpush1.bf16.msra.mxu0 0
        %679 = vmatprep.subr.bf16.mxu0 0
        %680 = vmatpush1.bf16.msra.mxu0 0
        %681 = vmatprep.subr.bf16.mxu0 0
        %682 = vmatpush1.bf16.msra.mxu0 0
        %683 = vmatprep.mubr.bf16.mxu0 0
        %684 = vmatmul.mubr.bf16.gmra.mrb[0].mxu0 %v646
        %v685 = vpop.f32.mrb[0].mxu0
        %v686 = vadd.f32 %v642, %v685
        %v687 = vpop.f32.mrb[0].mxu0
        %v688 = vpop.f32.mrb[0].mxu0
        %v689 = vpop.f32.mrb[0].mxu0
        %690 = vdwg.mxu0
        %v691 = vadd.f32 %v636, %v686
        %v692 = vadd.f32 %v627, %v686
        %693 = vst [vmem:[%s339] sm:$0xff] %v691
        %694 = vst [vmem:[%s339 + $0x8] sm:$0xff] %v692
        %s695 = sand.u32 %s226, 1
        %s696 = scalar_lea.sflag [#allocation7], %s695
        %s697 = sand.u32 %s226, 1
        %s698 = smul.addr %s697, 16
        %s699 = scalar_lea.vmem [#allocation6], %s698
        // Predicated region
        $region57: #{tpu_custom_call.1} parent=51 // pred_check
          %p700 = pneg %p236
        $region58: #{tpu_custom_call.1} parent=51 // pred_check_branch
          %702 = sbr.rel (%p700) target = $region60
        $region59: #{tpu_custom_call.1} parent=51 // pred_region
          %s704 = ssub.s32 256, 256
          %705 = vsyncadd %s696, %s704
          %s706 = smul.addr %s26, 2
          %s707 = sadd.s32 %s27, %s706
          %s708 = smul.addr %s707, 128
          %s709 = scalar_lea.hbm %s8, %s708
          %s710 = sshll.u32 %s699, 4
          %s711 = int_to_ptr.vmem [resolvable:$true] %s710
          %716 = dma.vmem_to_hbm [thread:$0]  %s711, 256, %s709, %s696, 128, 128, 8
        $region60: #{tpu_custom_call.1} parent=51 // pred_fallthru
          _
      $region52: #{tpu_custom_call.1} parent=5 // pred_fallthru
        _
      %p717 = scmp.le.s32.totalorder 2, %s17
      // Predicated region
      $region61: #{tpu_custom_call.1} parent=5 // pred_check
        %p718 = pneg %p717
      $region62: #{tpu_custom_call.1} parent=5 // pred_check_branch
        %720 = sbr.rel (%p718) target = $region64
      $region63: #{tpu_custom_call.1} parent=5 // pred_region
        %s721 = ssub.s32 %s17, 2
        // Predicated region
        $region65: #{tpu_custom_call.1} parent=63 // pred_check
          %p722 = pneg %p242
        $region66: #{tpu_custom_call.1} parent=63 // pred_check_branch
          %724 = sbr.rel (%p722) target = $region68
        $region67: #{tpu_custom_call.1} parent=63 // pred_region
          %s725 = sand.u32 %s227, 1
          %s726 = scalar_lea.sflag [#allocation7], %s725
          %s727 = sand.u32 %s227, 1
          %s728 = smul.addr %s727, 16
          %s729 = scalar_lea.vmem [#allocation6], %s728
          %730 = dma.done %s726, 256
        $region68: #{tpu_custom_call.1} parent=63 // pred_fallthru
          _
      $region64: #{tpu_custom_call.1} parent=5 // pred_fallthru
        _
    $region6: #{tpu_custom_call.1} parent=1 // loop_footer
      %s21 = sadd.s32 1, %s17
    $region7: #{tpu_custom_call.1} parent=1 // loop_footer_branch
      %16 = sbr.rel target = $region3
    $region8: #{tpu_custom_call.1} parent=1 // loop_exit
      _
    %731 = vsyncpa [#allocation7], 1
    %s732 = scalar_lea.sflag [#allocation7], 1
    %733 = vsyncpa %s732, 1

</llo_original>
